<compile_context>
chip_gen: v7x
topology: tpu7x:2x2x1
jax: 0.10.0
libtpu: 0.0.40
codegen_flags: <defaults>
</compile_context>

<pallas_src>
import jax
import jax.numpy as jnp
from jax.experimental import pallas as pl
from jax.experimental.pallas import tpu as pltpu

_LANES = 128
_SUBLANES = 8
_EPS = 1e-8  # F.cosine_similarity default eps


def _cdiv(a, b):
    return -(-a // b)


def _round_up(x, m):
    return _cdiv(x, m) * m


def _make_partials_kernel(tm, rows, use_weight, need_mask):
    """Per-tile partial sums of p.g / p.p / g.g over a (tm, 128) tile.

    Writes one full (8, 128) block per grid step: sublane 0 = dot partials,
    1 = p.p partials, 2 = g.g partials, 3..7 = 0.  Single unmasked store.
    """

    def kernel(*refs):
        if use_weight:
            p_ref, g_ref, w_ref, out_ref = refs
        else:
            p_ref, g_ref, out_ref = refs

        # In-kernel upcast: narrow inputs travel narrow over HBM.
        p = p_ref[...].astype(jnp.float32)
        g = g_ref[...].astype(jnp.float32)
        if use_weight:
            sw = jnp.sqrt(w_ref[...].astype(jnp.float32))  # EUP slot, ~free
            p = p * sw
            g = g * sw

        pg = p * g
        pp = p * p
        gg = g * g

        if need_mask:
            # Boundary block: rows >= `valid` hold unspecified data (no explicit
            # zero pad any more) -> select them away (NaN * 0 would be NaN).
            i = pl.program_id(0)
            valid = jnp.minimum(jnp.int32(rows) - i * jnp.int32(tm), jnp.int32(tm))
            row = jax.lax.broadcasted_iota(jnp.int32, (tm, _LANES), 0)
            keep = row < valid
            zero = jnp.float32(0.0)
            pg = jnp.where(keep, pg, zero)
            pp = jnp.where(keep, pp, zero)
            gg = jnp.where(keep, gg, zero)

        dot_row = jnp.sum(pg, axis=0, keepdims=True)  # (1, 128)
        pp_row = jnp.sum(pp, axis=0, keepdims=True)
        gg_row = jnp.sum(gg, axis=0, keepdims=True)

        # Assemble the (8, 128) output tile with sublane-broadcast selects
        # (robust lowering; avoids ragged sublane concatenation).
        sub = jax.lax.broadcasted_iota(jnp.int32, (_SUBLANES, _LANES), 0)
        out = jnp.zeros((_SUBLANES, _LANES), jnp.float32)
        out = jnp.where(sub == 0, dot_row, out)
        out = jnp.where(sub == 1, pp_row, out)
        out = jnp.where(sub == 2, gg_row, out)
        out_ref[...] = out

    return kernel


def sim_loss(predictions, correct_output, weight=None, *,
             max_tile_rows=2048, min_tile_rows=512,
             small_input_elems=16384, force_pallas=False):
    """Pallas TPU implementation of SIMLoss.forward. Returns a (1,) f32 array."""
    assert predictions.ndim == 1
    assert predictions.shape == correct_output.shape
    use_weight = weight is not None
    if use_weight:
        assert weight.shape == predictions.shape

    b = predictions.shape[0]

    # Tiny inputs: launch + plumbing dominates; a fused XLA reduction wins.
    if not force_pallas and b <= small_input_elems:
        return _reference(predictions, correct_output, weight)

    # Lane-dense (rows, 128) views.  For B % 128 == 0 this reshape is a free
    # metadata change (no HBM copy).  Otherwise pad only the final partial row.
    # TODO(synk): a fully pad-free path for B % 128 != 0 would need 1-D blocks
    # (or manual DMA) with in-kernel element masking.
    pad = (-b) % _LANES

    def as_rows(x):
        if pad:
            x = jnp.pad(x, (0, pad))
        return x.reshape(-1, _LANES)

    rows = _cdiv(b, _LANES)

    # Tile-row selection: ~1 MiB f32 blocks by default, but keep >= ~8 grid
    # steps on large inputs (pipeline ramp; v7x megacore sharding).
    rows8 = _round_up(rows, _SUBLANES)
    if rows8 <= max_tile_rows:
        tm = rows8
    else:
        tm = min(max_tile_rows,
                 max(min_tile_rows, _round_up(_cdiv(rows8, 8), _SUBLANES)))
    num_tiles = _cdiv(rows, tm)
    need_mask = (rows % tm) != 0  # last tile has unspecified rows -> mask

    inputs = [as_rows(predictions), as_rows(correct_output)]
    if use_weight:
        inputs.append(as_rows(weight))

    in_specs = [pl.BlockSpec((tm, _LANES), lambda i: (i, 0)) for _ in inputs]
    out_spec = pl.BlockSpec((_SUBLANES, _LANES), lambda i: (0, i))
    out_shape = jax.ShapeDtypeStruct((_SUBLANES, num_tiles * _LANES), jnp.float32)

    kernel = _make_partials_kernel(tm, rows, use_weight, need_mask)
    partials = pl.pallas_call(
        kernel,
        grid=(num_tiles,),
        in_specs=in_specs,
        out_specs=out_spec,
        out_shape=out_shape,
        compiler_params=pltpu.CompilerParams(
            dimension_semantics=("parallel",)),  # disjoint tiles -> 2 TCs on v7x
    )(*inputs)

    # Tiny final combine on the (3, num_tiles*128) partials.
    dot = jnp.sum(partials[0])
    p_norm = jnp.sqrt(jnp.sum(partials[1]))
    g_norm = jnp.sqrt(jnp.sum(partials[2]))
    # Match F.cosine_similarity: clamp the *product* of the norms by eps.
    cos = dot / jnp.maximum(p_norm * g_norm, jnp.float32(_EPS))
    return jnp.reshape(jnp.float32(1.0) - cos, (1,))


def _reference(predictions, correct_output, weight=None):
    """Pure-JAX mirror of the PyTorch SIMLoss.forward."""
    p = predictions.astype(jnp.float32)
    g = correct_output.astype(jnp.float32)
    if weight is not None:
        sw = jnp.sqrt(weight.astype(jnp.float32))
        p = p * sw
        g = g * sw
    dot = jnp.sum(p * g)
    denom = jnp.maximum(jnp.sqrt(jnp.sum(p * p)) * jnp.sqrt(jnp.sum(g * g)), _EPS)
    return jnp.reshape(1.0 - dot / denom, (1,))


if __name__ == "__main__":
    key = jax.random.PRNGKey(0)
    keys = jax.random.split(key, 8)

    # Case 1: small batch of per-sample scores (module-typical), forced through
    # the Pallas path (single tile, padded partial row + masked tail rows).
    B = 32
    p = jax.random.normal(keys[0], (B,), dtype=jnp.float32)
    g = jax.random.normal(keys[1], (B,), dtype=jnp.float32)
    w = jax.random.uniform(keys[2], (B,), dtype=jnp.float32)
    out_small_nw = sim_loss(p, g, None, force_pallas=True)
    out_small_w = sim_loss(p, g, w, force_pallas=True)

    # Case 2: non-aligned batch with tiny tiles -> multi-tile grid + masked tail.
    B2 = 2600
    p2 = jax.random.normal(keys[3], (B2,), dtype=jnp.float32)
    g2 = jax.random.normal(keys[4], (B2,), dtype=jnp.float32)
    w2 = jax.random.uniform(keys[5], (B2,), dtype=jnp.float32)
    out_multi = sim_loss(p2, g2, w2, force_pallas=True,
                         max_tile_rows=8, min_tile_rows=8)

    # Case 3: lane-aligned bf16 inputs -> zero-copy reshape + in-kernel upcast.
    B3 = 4096
    p3 = jax.random.normal(keys[6], (B3,), dtype=jnp.bfloat16)
    g3 = jax.random.normal(keys[7], (B3,), dtype=jnp.bfloat16)
    out_bf16 = sim_loss(p3, g3, None, force_pallas=True)

    # Case 4: default small-input fallback (pure JAX, no Pallas launch).
    out_fallback = sim_loss(p, g, w)

    jax.block_until_ready((out_small_nw, out_small_w, out_multi, out_bf16,
                           out_fallback))

    ref_small_nw = _reference(p, g, None)
    ref_small_w = _reference(p, g, w)
    ref_multi = _reference(p2, g2, w2)
    ref_bf16 = _reference(p3, g3, None)

    assert out_small_nw.shape == (1,) and out_small_w.shape == (1,)
    assert jnp.allclose(out_small_nw, ref_small_nw, atol=1e-5, rtol=1e-5), (
        out_small_nw, ref_small_nw)
    assert jnp.allclose(out_small_w, ref_small_w, atol=1e-5, rtol=1e-5), (
        out_small_w, ref_small_w)
    assert jnp.allclose(out_multi, ref_multi, atol=1e-5, rtol=1e-5), (
        out_multi, ref_multi)
    assert jnp.allclose(out_bf16, ref_bf16, atol=1e-2, rtol=1e-2), (
        out_bf16, ref_bf16)
    assert jnp.allclose(out_fallback, ref_small_w, atol=1e-6, rtol=1e-6), (
        out_fallback, ref_small_w)

    print("KERNEL_OK")
</pallas_src>

<mosaic_0001>
module attributes {stable_mosaic.version = 11 : i64} {
  func.func @kernel(%arg0: i32, %arg1: memref<8x128xf32, #tpu.memory_space<vmem>>, %arg2: memref<8x128xf32, #tpu.memory_space<vmem>>, %arg3: memref<8x128xf32, #tpu.memory_space<vmem>>) attributes {dimension_semantics = [#tpu.dimension_semantics<parallel>], iteration_bounds = array<i64: 1>, scalar_prefetch = 0 : i64, scratch_operands = 0 : i64, tpu.core_type = #tpu.core_type<tc>, window_params = [{transform_indices = @transform_0, window_bounds = array<i64: 8, 128>}, {transform_indices = @transform_1, window_bounds = array<i64: 8, 128>}, {transform_indices = @transform_2, window_bounds = array<i64: 8, 128>}]} {
    %c0 = arith.constant 0 : index
    %c0_0 = arith.constant 0 : index
    %0 = vector.load %arg1[%c0, %c0_0] : memref<8x128xf32, #tpu.memory_space<vmem>>, vector<8x128xf32>
    %c0_1 = arith.constant 0 : index
    %c0_2 = arith.constant 0 : index
    %1 = vector.load %arg2[%c0_1, %c0_2] : memref<8x128xf32, #tpu.memory_space<vmem>>, vector<8x128xf32>
    %2 = arith.mulf %0, %1 : vector<8x128xf32>
    %3 = arith.mulf %0, %0 : vector<8x128xf32>
    %4 = arith.mulf %1, %1 : vector<8x128xf32>
    %c8_i32 = arith.constant 8 : i32
    %5 = arith.muli %arg0, %c8_i32 : i32
    %c1_i32 = arith.constant 1 : i32
    %6 = arith.subi %c1_i32, %5 : i32
    %c8_i32_3 = arith.constant 8 : i32
    %7 = arith.minsi %6, %c8_i32_3 : i32
    %8 = tpu.iota {dimensions = array<i32: 0>} : vector<8x128xi32>
    %9 = vector.broadcast %7 : i32 to vector<8x128xi32>
    %10 = arith.cmpi slt, %8, %9 : vector<8x128xi32>
    %cst = arith.constant 0.000000e+00 : f32
    %11 = vector.broadcast %cst : f32 to vector<8x128xf32>
    %12 = arith.select %10, %2, %11 : vector<8x128xi1>, vector<8x128xf32>
    %cst_4 = arith.constant 0.000000e+00 : f32
    %13 = vector.broadcast %cst_4 : f32 to vector<8x128xf32>
    %14 = arith.select %10, %3, %13 : vector<8x128xi1>, vector<8x128xf32>
    %cst_5 = arith.constant 0.000000e+00 : f32
    %15 = vector.broadcast %cst_5 : f32 to vector<8x128xf32>
    %16 = arith.select %10, %4, %15 : vector<8x128xi1>, vector<8x128xf32>
    %cst_6 = arith.constant dense<0.000000e+00> : vector<128xf32>
    %17 = vector.multi_reduction <add>, %12, %cst_6 [0] : vector<8x128xf32> to vector<128xf32>
    %18 = vector.shape_cast %17 : vector<128xf32> to vector<1x128xf32>
    %cst_7 = arith.constant dense<0.000000e+00> : vector<128xf32>
    %19 = vector.multi_reduction <add>, %14, %cst_7 [0] : vector<8x128xf32> to vector<128xf32>
    %20 = vector.shape_cast %19 : vector<128xf32> to vector<1x128xf32>
    %cst_8 = arith.constant dense<0.000000e+00> : vector<128xf32>
    %21 = vector.multi_reduction <add>, %16, %cst_8 [0] : vector<8x128xf32> to vector<128xf32>
    %22 = vector.shape_cast %21 : vector<128xf32> to vector<1x128xf32>
    %23 = tpu.iota {dimensions = array<i32: 0>} : vector<8x128xi32>
    %cst_9 = arith.constant 0.000000e+00 : f32
    %24 = vector.broadcast %cst_9 : f32 to vector<8x128xf32>
    %c0_i32 = arith.constant 0 : i32
    %25 = vector.broadcast %c0_i32 : i32 to vector<8x128xi32>
    %26 = arith.cmpi eq, %23, %25 : vector<8x128xi32>
    %27 = vector.shape_cast %18 : vector<1x128xf32> to vector<1x128xf32>
    %28 = vector.broadcast %27 : vector<1x128xf32> to vector<8x128xf32>
    %29 = arith.select %26, %28, %24 : vector<8x128xi1>, vector<8x128xf32>
    %c1_i32_10 = arith.constant 1 : i32
    %30 = vector.broadcast %c1_i32_10 : i32 to vector<8x128xi32>
    %31 = arith.cmpi eq, %23, %30 : vector<8x128xi32>
    %32 = vector.shape_cast %20 : vector<1x128xf32> to vector<1x128xf32>
    %33 = vector.broadcast %32 : vector<1x128xf32> to vector<8x128xf32>
    %34 = arith.select %31, %33, %29 : vector<8x128xi1>, vector<8x128xf32>
    %c2_i32 = arith.constant 2 : i32
    %35 = vector.broadcast %c2_i32 : i32 to vector<8x128xi32>
    %36 = arith.cmpi eq, %23, %35 : vector<8x128xi32>
    %37 = vector.shape_cast %22 : vector<1x128xf32> to vector<1x128xf32>
    %38 = vector.broadcast %37 : vector<1x128xf32> to vector<8x128xf32>
    %39 = arith.select %36, %38, %34 : vector<8x128xi1>, vector<8x128xf32>
    %c0_11 = arith.constant 0 : index
    %c0_12 = arith.constant 0 : index
    %40 = vector.load %arg3[%c0_11, %c0_12] : memref<8x128xf32, #tpu.memory_space<vmem>>, vector<8x128xf32>
    tpu.vector_store %arg3[%c0_11, %c0_12], %39 {strides = array<i32>} : memref<8x128xf32, #tpu.memory_space<vmem>>, vector<8x128xf32>,
    return
  }
  func.func @transform_0(%arg0: i32) -> (i32, i32) {
    %c0_i32 = arith.constant 0 : i32
    %c0_i32_0 = arith.constant 0 : i32
    return %arg0, %c0_i32 : i32, i32
  }
  func.func @transform_1(%arg0: i32) -> (i32, i32) {
    %c0_i32 = arith.constant 0 : i32
    %c0_i32_0 = arith.constant 0 : i32
    return %arg0, %c0_i32 : i32, i32
  }
  func.func @transform_2(%arg0: i32) -> (i32, i32) {
    %c0_i32 = arith.constant 0 : i32
    %c0_i32_0 = arith.constant 0 : i32
    return %c0_i32, %arg0 : i32, i32
  }
}

</mosaic_0001>

<llo_original>
// kernel: tpu_custom_call.1
$region0: #{tpu_custom_call.1}
  #allocation0 [shape = 'u32[]', space=smem, size = 0x4, offset = 0x4, fixed_abs, tag = 'smem constant byte address 0x4 - core index']
  #allocation1 [shape = 'u32[144,128]{1,0:T(1,128)}', space=vmem, size = 0x12000, scoped, tag = 'internal scratch']
  %s0 = inlined_call_operand.hbm [shape: f32[1,128], index: 0, kind: input, shape index: {}]
  %s1 = inlined_call_operand.vmem [shape: f32[1,128], index: 1, kind: input, shape index: {}]
  %s2 = inlined_call_operand.hbm [shape: f32[8,128], index: 2, kind: output, shape index: {}]
  %s3 = sld [smem:[#allocation0]]
  $region22: #{tpu_custom_call.1} parent=0
    _
  %s5 = ssub.s32 1, %s3
  %s6 = scalar_select 0, %s5, %s3
  $region1: #{tpu_custom_call.1} parent=0
    #allocation2 [shape = 'u8[4096]{0}', space=vmem, size = 0x1000, scoped, tag = 'input window, operand 0, single buffered']
    #allocation3 [shape = 's32[1]{0}', space=sflag, size = 0x4, scoped, tag = 'scoped memory for tpu_custom_call.1']
    #allocation4 [shape = 's32[1]{0}', space=sflag, size = 0x4, scoped, tag = 'scoped memory for tpu_custom_call.1']
    #allocation5 [shape = 'u8[4096]{0}', space=vmem, size = 0x1000, scoped, tag = 'output window, operand 0, single buffered']
    %7 = vsyncpa [#allocation3], 0
    %8 = vsyncpa [#allocation4], 0
    // Predicated region
    $region2: #{tpu_custom_call.1} parent=1 // pred_check
      _
    $region3: #{tpu_custom_call.1} parent=1 // pred_check_branch
      %10 = sbr.rel (0) target = $region5
    $region4: #{tpu_custom_call.1} parent=1 // pred_region
      %s12 = ssub.s32 128, 16
      %13 = vsyncadd [#allocation3], %s12
      %s14 = sshll.u32 [#allocation2], 4
      %s15 = int_to_ptr.vmem [resolvable:$true] %s14
      %20 = dma.hbm_to_vmem [thread:$0]  %s0, 16, %s15, [#allocation3], 16, 16, 1
    $region5: #{tpu_custom_call.1} parent=1 // pred_fallthru
      _
    // Predicated region
    $region6: #{tpu_custom_call.1} parent=1 // pred_check
      _
    $region7: #{tpu_custom_call.1} parent=1 // pred_check_branch
      %22 = sbr.rel (0) target = $region9
    $region8: #{tpu_custom_call.1} parent=1 // pred_region
      _
    $region9: #{tpu_custom_call.1} parent=1 // pred_fallthru
      _
    // Predicated region
    $region10: #{tpu_custom_call.1} parent=1 // pred_check
      _
    $region11: #{tpu_custom_call.1} parent=1 // pred_check_branch
      %24 = sbr.rel (0) target = $region13
    $region12: #{tpu_custom_call.1} parent=1 // pred_region
      %25 = dma.done [#allocation3], 128
    $region13: #{tpu_custom_call.1} parent=1 // pred_fallthru
      _
    %v26 = vld [vmem:[#allocation2] sm:$0xff]
    %v27 = vld [vmem:[%s1] sm:$0xff]
    %v28 = vmul.f32 %v26, %v27
    %v29 = vmul.f32 %v26, %v26
    %v30 = vmul.f32 %v27, %v27
    %s31 = smul.u32 0, 8
    %s32 = ssub.s32 1, %s31
    %p33 = scmp.lt.s32.totalorder %s32, 8
    %s34 = scalar_select %p33, %s32, 8
    %v35 = vlaneseq
    %v36 = vshrl.u32 %v35, 7
    %v37 = vstv %s34
    %vm38 = vcmp.lt.s32.totalorder %v36, %v37
    %v39 = vsel %vm38, %v28, 0.0
    %v40 = vsel %vm38, %v29, 0.0
    %v41 = vsel %vm38, %v30, 0.0
    %v42 = vrot.slane %v39, 4
    %v43 = vadd.f32 %v39, %v42
    %v44 = vrot.slane %v43, 2
    %v45 = vadd.f32 %v43, %v44
    %v46 = vrot.slane %v45, 1
    %v47 = vadd.f32 %v45, %v46
    %v48 = vrot.slane %v40, 4
    %v49 = vadd.f32 %v40, %v48
    %v50 = vrot.slane %v49, 2
    %v51 = vadd.f32 %v49, %v50
    %v52 = vrot.slane %v51, 1
    %v53 = vadd.f32 %v51, %v52
    %v54 = vrot.slane %v41, 4
    %v55 = vadd.f32 %v41, %v54
    %v56 = vrot.slane %v55, 2
    %v57 = vadd.f32 %v55, %v56
    %v58 = vrot.slane %v57, 1
    %v59 = vadd.f32 %v57, %v58
    %vm60 = vcmp.eq.s32.totalorder %v36, 0
    %v61 = vsel %vm60, %v47, 0.0
    %vm62 = vcmp.eq.s32.totalorder %v36, 1
    %v63 = vsel %vm62, %v53, %v61
    %vm64 = vcmp.eq.s32.totalorder %v36, 2
    %v65 = vsel %vm64, %v59, %v63
    %66 = vst [vmem:[#allocation5] sm:$0xff] %v65
    // Predicated region
    $region14: #{tpu_custom_call.1} parent=1 // pred_check
      _
    $region15: #{tpu_custom_call.1} parent=1 // pred_check_branch
      %68 = sbr.rel (0) target = $region17
    $region16: #{tpu_custom_call.1} parent=1 // pred_region
      %s70 = ssub.s32 128, 128
      %71 = vsyncadd [#allocation4], %s70
      %s73 = sshll.u32 [#allocation5], 4
      %s74 = int_to_ptr.vmem [resolvable:$true] %s73
      %76 = dma.vmem_to_hbm [thread:$0]  %s74, 128, %s2, [#allocation4]
    $region17: #{tpu_custom_call.1} parent=1 // pred_fallthru
      _
    // Predicated region
    $region18: #{tpu_custom_call.1} parent=1 // pred_check
      _
    $region19: #{tpu_custom_call.1} parent=1 // pred_check_branch
      %78 = sbr.rel (0) target = $region21
    $region20: #{tpu_custom_call.1} parent=1 // pred_region
      %79 = dma.done [#allocation4], 128
    $region21: #{tpu_custom_call.1} parent=1 // pred_fallthru
      _
    %80 = vsyncpa [#allocation3], 1
    %81 = vsyncpa [#allocation4], 1

</llo_original>
